<compile_context>
chip_gen: v7x
topology: tpu7x:2x2x1
jax: 0.10.0
libtpu: 0.0.40
codegen_flags: <defaults>
</compile_context>

<pallas_src>
import functools

import jax
import jax.numpy as jnp
from jax.experimental import pallas as pl
from jax.experimental.pallas import tpu as pltpu

LANE = 128
SMALL_BYPASS_BYTES = 2 << 20       # below ~2 MiB XLA's fused mean is faster
VMEM_LIMIT_BYTES = 32 << 20        # safe on v5e/v6e/v7x (<= physical on all)


def _round_up(a, b):
    return -(-a // b) * b


def _cdiv(a, b):
    return -(-a // b)


def _device_kind():
    try:
        return jax.devices()[0].device_kind.lower()
    except Exception:
        return ""


def _hw_params():
    """(target bytes per block, number of TensorCores to shard over)."""
    kind = _device_kind()
    if "v7" in kind:
        # ~3.2 TB/s HBM: 8 MiB blocks keep the ~0.35us/step overhead <5%.
        # 2 TensorCores, each with its own DMA path.
        return 8 << 20, 2
    # v6e / v5e / unknown: 1 TensorCore. 4 MiB blocks double-buffered (8 MiB)
    # stay under even v5e's 16 MiB default scoped VMEM.
    return 4 << 20, 1


def _partial_sum_kernel(x_ref, o_ref, *, rows_total, row_tile, needs_mask):
    """Accumulate one (row_tile, 128) block into a per-core (8, 128) partial sum."""
    step = pl.program_id(1)

    @pl.when(step == 0)
    def _():
        o_ref[...] = jnp.zeros_like(o_ref)

    x = x_ref[...].astype(jnp.float32)                    # (row_tile, 128)

    def accum(xv):
        # Vreg-shaped accumulation: pure vld + VPU adds in the hot loop,
        # no per-step cross-lane (XLU) reduction.
        partial = xv.reshape(row_tile // 8, 8, LANE).sum(axis=0)
        o_ref[...] += partial.reshape(1, 8, LANE)

    if not needs_mask:
        accum(x)
    else:
        # Intended (unclamped) global block index; >= num_blocks for the
        # duplicated tail blocks on the second core.
        blk = pl.program_id(0) * pl.num_programs(1) + step
        is_tail = (blk + 1) * row_tile > rows_total

        @pl.when(jnp.logical_not(is_tail))
        def _():
            accum(x)

        @pl.when(is_tail)
        def _():
            # Zero rows beyond the real extent (partial last block and/or
            # duplicated tail blocks).  Only the tail block(s) pay for the
            # iota + compare + select; the common path above is mask-free.
            row_ids = blk * row_tile + jax.lax.broadcasted_iota(
                jnp.int32, (row_tile, LANE), 0)
            accum(jnp.where(row_ids < rows_total, x, 0.0))


def loss_forward(x_fake, reg=1.0, transform=lambda x: x, *,
                 block_bytes=None, force_pallas=False):
    """reg * mean(compute(x_fake)) with compute == transform (identity)."""
    loss_componentwise = transform(x_fake)                # identity by default
    flat = loss_componentwise.reshape(-1)                 # layout-free
    n = flat.shape[0]
    itemsize = flat.dtype.itemsize
    nbytes = n * itemsize

    # Tiny inputs: kernel launch + pipeline prologue dominates; use XLA.
    if (not force_pallas) and nbytes < SMALL_BYPASS_BYTES:
        return (reg * jnp.mean(flat.astype(jnp.float32))).astype(jnp.float32)

    hw_block_bytes, num_cores_hw = _hw_params()
    if block_bytes is None:
        block_bytes = hw_block_bytes

    # Ragged tail (< 128 elements): summed in the wrapper -- no jnp.pad copy
    # of the whole tensor.  The kernel only sees the lane-aligned prefix.
    rem = n % LANE
    main = n - rem
    tail_sum = jnp.sum(flat[main:].astype(jnp.float32)) if rem else jnp.float32(0.0)

    if main == 0:
        # Whole input is a ragged tail (< 128 elements).
        return (reg * (tail_sum / n)).astype(jnp.float32)

    rows = main // LANE
    x2d = flat[:main].reshape(rows, LANE)                 # layout-free

    # Dtype-aware block size: fixed byte budget per block, multiple of 8 rows.
    target_rows = max(8, block_bytes // (LANE * itemsize))
    row_tile = _round_up(min(target_rows, _round_up(rows, 8)), 8)

    num_blocks = _cdiv(rows, row_tile)
    num_cores = max(1, min(num_cores_hw, num_blocks))
    steps_per_core = _cdiv(num_blocks, num_cores)
    # True iff a partial last block and/or duplicated tail block exists.
    needs_mask = (num_cores * steps_per_core * row_tile != rows)

    def in_index(c, i):
        # Clamp so a duplicated tail block never DMAs past the array end;
        # the in-kernel tail mask zeroes its contribution.
        return (jnp.minimum(c * steps_per_core + i, num_blocks - 1), 0)

    kernel = functools.partial(_partial_sum_kernel, rows_total=rows,
                               row_tile=row_tile, needs_mask=needs_mask)

    partials = pl.pallas_call(
        kernel,
        out_shape=jax.ShapeDtypeStruct((num_cores, 8, LANE), jnp.float32),
        grid=(num_cores, steps_per_core),
        in_specs=[pl.BlockSpec((row_tile, LANE), in_index)],
        out_specs=pl.BlockSpec((1, 8, LANE), lambda c, i: (c, 0, 0)),
        compiler_params=pltpu.CompilerParams(
            dimension_semantics=("parallel", "arbitrary"),
            vmem_limit_bytes=VMEM_LIMIT_BYTES),
        cost_estimate=pl.CostEstimate(
            flops=int(main), transcendentals=0,
            bytes_accessed=int(main * itemsize) + num_cores * 8 * LANE * 4),
    )(x2d)

    # Final tiny reduction (num_cores*8*128 elements) + reg scaling in the
    # wrapper, so `reg` is never baked into the kernel (no recompiles when it
    # varies).
    total = jnp.sum(partials) + tail_sum
    return (reg * (total / n)).astype(jnp.float32)


if __name__ == "__main__":
    key = jax.random.PRNGKey(0)
    k1, k2, k3, k4 = jax.random.split(key, 4)

    def ref_loss(x, reg):
        return reg * jnp.mean(x.astype(jnp.float32))

    # 1) Small NCHW demo shape consistent with the module; force the Pallas
    #    path so the kernel is exercised, and also test the bypass path.
    x1 = jax.random.normal(k1, (2, 4, 16, 16), dtype=jnp.float32)
    out1 = jax.block_until_ready(loss_forward(x1, reg=1.0, force_pallas=True))
    assert jnp.allclose(out1, ref_loss(x1, 1.0), rtol=1e-5, atol=1e-5), \
        (out1, ref_loss(x1, 1.0))
    out1b = jax.block_until_ready(loss_forward(x1, reg=0.5))
    assert jnp.allclose(out1b, ref_loss(x1, 0.5), rtol=1e-5, atol=1e-5), \
        (out1b, ref_loss(x1, 0.5))

    # 2) Input with a partial last block (rows not a multiple of the tile):
    #    exercises the tail-only mask path.
    x2 = jax.random.normal(k2, (2, 8, 130, 128), dtype=jnp.float32)
    out2 = jax.block_until_ready(loss_forward(x2, reg=0.7, force_pallas=True))
    assert jnp.allclose(out2, ref_loss(x2, 0.7), rtol=1e-5, atol=1e-5), \
        (out2, ref_loss(x2, 0.7))

    # 3) Ragged element count (not a multiple of 128): wrapper-side tail sum.
    x3 = jax.random.normal(k3, (3, 5, 7, 11), dtype=jnp.float32)
    out3 = jax.block_until_ready(loss_forward(x3, reg=2.0, force_pallas=True))
    assert jnp.allclose(out3, ref_loss(x3, 2.0), rtol=1e-5, atol=1e-5), \
        (out3, ref_loss(x3, 2.0))

    # 4) bf16 input: dtype-aware block sizing path.
    x4 = jax.random.normal(k4, (2, 4, 32, 32), dtype=jnp.bfloat16)
    out4 = jax.block_until_ready(loss_forward(x4, reg=1.3, force_pallas=True))
    assert jnp.allclose(out4, ref_loss(x4, 1.3), rtol=1e-3, atol=1e-3), \
        (out4, ref_loss(x4, 1.3))

    print("KERNEL_OK")
</pallas_src>

<mosaic_0001>
module attributes {stable_mosaic.version = 11 : i64} {
  func.func @_partial_sum_kernel(%arg0: i32, %arg1: i32, %arg2: memref<16x128xf32, #tpu.memory_space<vmem>>, %arg3: memref<1x8x128xf32, #tpu.memory_space<vmem>>) attributes {dimension_semantics = [#tpu.dimension_semantics<parallel>, #tpu.dimension_semantics<arbitrary>], iteration_bounds = array<i64: 1, 1>, scalar_prefetch = 0 : i64, scratch_operands = 0 : i64, tpu.core_type = #tpu.core_type<tc>, window_params = [{transform_indices = @transform_0, window_bounds = array<i64: 16, 128>}, {transform_indices = @transform_1, window_bounds = array<i64: 1, 8, 128>}]} {
    %c0_i32 = arith.constant 0 : i32
    %0 = arith.cmpi eq, %arg1, %c0_i32 : i32
    %1 = arith.extui %0 : i1 to i32
    %c0_i32_0 = arith.constant 0 : i32
    %2 = arith.cmpi ne, %1, %c0_i32_0 : i32
    scf.if %2 {
      %cst_8 = arith.constant 0.000000e+00 : f32
      %10 = vector.broadcast %cst_8 : f32 to vector<1x8x128xf32>
      %c0_9 = arith.constant 0 : index
      %c0_10 = arith.constant 0 : index
      %c0_11 = arith.constant 0 : index
      %11 = vector.load %arg3[%c0_9, %c0_10, %c0_11] : memref<1x8x128xf32, #tpu.memory_space<vmem>>, vector<1x8x128xf32>
      tpu.vector_store %arg3[%c0_9, %c0_10, %c0_11], %10 {strides = array<i32>} : memref<1x8x128xf32, #tpu.memory_space<vmem>>, vector<1x8x128xf32>,
    } else {
    }
    %c0 = arith.constant 0 : index
    %c0_1 = arith.constant 0 : index
    %3 = vector.load %arg2[%c0, %c0_1] : memref<16x128xf32, #tpu.memory_space<vmem>>, vector<16x128xf32>
    %4 = vector.shape_cast %3 : vector<16x128xf32> to vector<2x8x128xf32>
    %cst = arith.constant dense<0.000000e+00> : vector<8x128xf32>
    %5 = vector.multi_reduction <add>, %4, %cst [0] : vector<2x8x128xf32> to vector<8x128xf32>
    %c0_2 = arith.constant 0 : index
    %c0_3 = arith.constant 0 : index
    %c0_4 = arith.constant 0 : index
    %6 = vector.load %arg3[%c0_2, %c0_3, %c0_4] : memref<1x8x128xf32, #tpu.memory_space<vmem>>, vector<1x8x128xf32>
    %7 = vector.shape_cast %5 : vector<8x128xf32> to vector<1x8x128xf32>
    %8 = arith.addf %6, %7 : vector<1x8x128xf32>
    %c0_5 = arith.constant 0 : index
    %c0_6 = arith.constant 0 : index
    %c0_7 = arith.constant 0 : index
    %9 = vector.load %arg3[%c0_5, %c0_6, %c0_7] : memref<1x8x128xf32, #tpu.memory_space<vmem>>, vector<1x8x128xf32>
    tpu.vector_store %arg3[%c0_5, %c0_6, %c0_7], %8 {strides = array<i32>} : memref<1x8x128xf32, #tpu.memory_space<vmem>>, vector<1x8x128xf32>,
    return
  }
  func.func @transform_0(%arg0: i32, %arg1: i32) -> (i32, i32) {
    %c1_i32 = arith.constant 1 : i32
    %0 = arith.muli %arg0, %c1_i32 : i32
    %1 = arith.addi %0, %arg1 : i32
    %c0_i32 = arith.constant 0 : i32
    %2 = arith.minsi %1, %c0_i32 : i32
    %c0_i32_0 = arith.constant 0 : i32
    %c0_i32_1 = arith.constant 0 : i32
    return %2, %c0_i32_0 : i32, i32
  }
  func.func @transform_1(%arg0: i32, %arg1: i32) -> (i32, i32, i32) {
    %c0_i32 = arith.constant 0 : i32
    %c0_i32_0 = arith.constant 0 : i32
    %c0_i32_1 = arith.constant 0 : i32
    return %arg0, %c0_i32, %c0_i32_0 : i32, i32, i32
  }
}

</mosaic_0001>

<llo_original>
// kernel: tpu_custom_call.1
$region0: #{tpu_custom_call.1}
  #allocation0 [shape = 'u32[]', space=smem, size = 0x4, offset = 0x4, fixed_abs, tag = 'smem constant byte address 0x4 - core index']
  #allocation1 [shape = 'u32[144,128]{1,0:T(1,128)}', space=vmem, size = 0x12000, scoped, tag = 'internal scratch']
  %s0 = inlined_call_operand.hbm [shape: f32[16,128], index: 0, kind: input, shape index: {}]
  %s1 = inlined_call_operand.hbm [shape: f32[1,8,128], index: 1, kind: output, shape index: {}]
  %s2 = sld [smem:[#allocation0]]
  $region22: #{tpu_custom_call.1} parent=0
    _
  %s4 = ssub.s32 1, %s2
  %s5 = scalar_select 0, %s4, %s2
  $region1: #{tpu_custom_call.1} parent=0
    #allocation2 [shape = 'u8[8192]{0}', space=vmem, size = 0x2000, scoped, tag = 'input window, operand 0, single buffered']
    #allocation3 [shape = 's32[1]{0}', space=sflag, size = 0x4, scoped, tag = 'scoped memory for tpu_custom_call.1']
    #allocation4 [shape = 's32[1]{0}', space=sflag, size = 0x4, scoped, tag = 'scoped memory for tpu_custom_call.1']
    #allocation5 [shape = 'u8[4096]{0}', space=vmem, size = 0x1000, scoped, tag = 'output window, operand 0, single buffered']
    %6 = vsyncpa [#allocation3], 0
    %7 = vsyncpa [#allocation4], 0
    // Predicated region
    $region2: #{tpu_custom_call.1} parent=1 // pred_check
      _
    $region3: #{tpu_custom_call.1} parent=1 // pred_check_branch
      %9 = sbr.rel (0) target = $region5
    $region4: #{tpu_custom_call.1} parent=1 // pred_region
      %s10 = sadd.s32 0, 0
      %p11 = scmp.lt.s32.totalorder %s10, 0
      %s12 = scalar_select %p11, %s10, 0
      %s13 = smul.u32 2, %s12
      %s15 = ssub.s32 256, 256
      %16 = vsyncadd [#allocation3], %s15
      %s17 = smul.addr %s13, 128
      %s18 = scalar_lea.hbm %s0, %s17
      %s19 = sshll.u32 [#allocation2], 4
      %s20 = int_to_ptr.vmem [resolvable:$true] %s19
      %25 = dma.hbm_to_vmem [thread:$0]  %s18, 256, %s20, [#allocation3], 128, 128, 8
    $region5: #{tpu_custom_call.1} parent=1 // pred_fallthru
      _
    // Predicated region
    $region6: #{tpu_custom_call.1} parent=1 // pred_check
      _
    $region7: #{tpu_custom_call.1} parent=1 // pred_check_branch
      %27 = sbr.rel (0) target = $region9
    $region8: #{tpu_custom_call.1} parent=1 // pred_region
      %28 = dma.done [#allocation3], 256
    $region9: #{tpu_custom_call.1} parent=1 // pred_fallthru
      _
    %s29 = sadd.s32 0, 0
    %p30 = scmp.lt.s32.totalorder %s29, 0
    %s31 = scalar_select %p30, %s29, 0
    %s32 = smul.u32 2, %s31
    %p33 = scmp.eq.s32.totalorder 0, 0
    // Predicated region
    $region10: #{tpu_custom_call.1} parent=1 // pred_check
      %p34 = pneg %p33
    $region11: #{tpu_custom_call.1} parent=1 // pred_check_branch
      %36 = sbr.rel (%p34) target = $region13
    $region12: #{tpu_custom_call.1} parent=1 // pred_region
      %37 = vst [vmem:[#allocation5] sm:$0xff] 0.0
    $region13: #{tpu_custom_call.1} parent=1 // pred_fallthru
      _
    %v38 = vld [vmem:[#allocation2] sm:$0xff]
    %v39 = vld [vmem:[#allocation2 + $0x8] sm:$0xff]
    %v40 = vadd.f32 %v38, %v39
    %v41 = vld [vmem:[#allocation5] sm:$0xff]
    %v42 = vadd.f32 %v41, %v40
    %43 = vst [vmem:[#allocation5] sm:$0xff] %v42
    // Predicated region
    $region14: #{tpu_custom_call.1} parent=1 // pred_check
      _
    $region15: #{tpu_custom_call.1} parent=1 // pred_check_branch
      %45 = sbr.rel (0) target = $region17
    $region16: #{tpu_custom_call.1} parent=1 // pred_region
      %s47 = ssub.s32 128, 128
      %48 = vsyncadd [#allocation4], %s47
      %s50 = sshll.u32 [#allocation5], 4
      %s51 = int_to_ptr.vmem [resolvable:$true] %s50
      %53 = dma.vmem_to_hbm [thread:$0]  %s51, 128, %s1, [#allocation4]
    $region17: #{tpu_custom_call.1} parent=1 // pred_fallthru
      _
    // Predicated region
    $region18: #{tpu_custom_call.1} parent=1 // pred_check
      _
    $region19: #{tpu_custom_call.1} parent=1 // pred_check_branch
      %55 = sbr.rel (0) target = $region21
    $region20: #{tpu_custom_call.1} parent=1 // pred_region
      %56 = dma.done [#allocation4], 128
    $region21: #{tpu_custom_call.1} parent=1 // pred_fallthru
      _
    %57 = vsyncpa [#allocation3], 1
    %58 = vsyncpa [#allocation4], 1

</llo_original>
